<compile_context>
chip_gen: v7x
topology: tpu7x:2x2x1
jax: 0.10.0
libtpu: 0.0.40
codegen_flags: <defaults>
</compile_context>

<pallas_src>
import functools
import math

import jax
import jax.numpy as jnp
from jax import lax
from jax.experimental import pallas as pl
from jax.experimental.pallas import tpu as pltpu


# --------------------------------------------------------------------------
# Helpers
# --------------------------------------------------------------------------
def _sublane_multiple(dtype) -> int:
    """Dtype-aware sublane alignment: 8 rows (f32), 16 (bf16), 32 (int8)."""
    return max(8, 32 // jnp.dtype(dtype).itemsize)


def _pick_tile(total: int, target: int, multiple: int) -> int:
    """Largest tile <= target that evenly divides `total` and is a multiple of
    `multiple`.  Falls back to the full extent (always a legal block)."""
    if total <= target:
        return total
    t = (target // multiple) * multiple
    while t >= multiple:
        if total % t == 0:
            return t
        t -= multiple
    # TODO(synk): pad awkward extents instead of falling back to the full
    # dimension (a very long, prime-ish S could exceed the VMEM budget here).
    return total


def _vmem_limit_bytes() -> int:
    """Generation-aware VMEM budget: ~80% of physical capacity
    (~102 MiB on v5e/v6e, ~51 MiB on v7x).  Conservative 51 MiB fallback."""
    cap = 64 * 1024 * 1024
    try:
        info = pltpu.get_tpu_info()
        cap = int(getattr(info, "vmem_capacity_bytes", cap))
    except Exception:
        pass
    return int(cap * 0.8)


# --------------------------------------------------------------------------
# Stage 1: fused Q/K/V projections over flattened (B*S, D) rows,
#          column-tiled over output features.
# --------------------------------------------------------------------------
def _qkv_proj_kernel(scale, shared_x, *refs):
    if shared_x:
        (x_ref, wq_ref, bq_ref, wk_ref, bk_ref, wv_ref, bv_ref,
         q_ref, k_ref, v_ref) = refs
        xq = xk = xv = x_ref[...]
    else:
        (xq_ref, xk_ref, xv_ref, wq_ref, bq_ref, wk_ref, bk_ref, wv_ref,
         bv_ref, q_ref, k_ref, v_ref) = refs
        xq, xk, xv = xq_ref[...], xk_ref[...], xv_ref[...]

    # Native-dtype operands straight into the MXU; f32 accumulation only.
    q = jnp.dot(xq, wq_ref[...], preferred_element_type=jnp.float32) + bq_ref[...]
    k = jnp.dot(xk, wk_ref[...], preferred_element_type=jnp.float32) + bk_ref[...]
    v = jnp.dot(xv, wv_ref[...], preferred_element_type=jnp.float32) + bv_ref[...]

    # Fold 1/sqrt(key_dim) into Q once per row (cheaper than scaling scores).
    q_ref[...] = (q * scale).astype(q_ref.dtype)
    k_ref[...] = k.astype(k_ref.dtype)
    v_ref[...] = v.astype(v_ref.dtype)


# --------------------------------------------------------------------------
# Stage 2: flash attention (online softmax), head axis in the grid.
# --------------------------------------------------------------------------
def _flash_attn_kernel(q_ref, k_ref, v_ref, o_ref, m_sc, l_sc, acc_sc):
    ki = pl.program_id(2)

    @pl.when(ki == 0)
    def _init():
        m_sc[...] = jnp.full_like(m_sc, -jnp.inf)
        l_sc[...] = jnp.zeros_like(l_sc)
        acc_sc[...] = jnp.zeros_like(acc_sc)

    q = q_ref[0]   # (TQ, kd), already scaled by 1/sqrt(key_dim)
    k = k_ref[0]   # (TK, kd)
    v = v_ref[0]   # (TK, kd)

    # Contract the key_dim axes directly -- no k.T / XLU transpose.
    s = lax.dot_general(q, k, (((1,), (1,)), ((), ())),
                        preferred_element_type=jnp.float32)      # (TQ, TK)

    m_prev = m_sc[...]                                           # (TQ, 1)
    m_new = jnp.maximum(m_prev, jnp.max(s, axis=-1, keepdims=True))
    alpha = jnp.exp(m_prev - m_new)
    p = jnp.exp(s - m_new)
    l_sc[...] = alpha * l_sc[...] + jnp.sum(p, axis=-1, keepdims=True)
    pv = jnp.dot(p.astype(v.dtype), v, preferred_element_type=jnp.float32)
    acc_sc[...] = alpha * acc_sc[...] + pv                       # full-block store
    m_sc[...] = m_new

    @pl.when(ki == pl.num_programs(2) - 1)
    def _finalize():
        # Exact reciprocal: runs once per output tile, costs ~nothing.
        inv_l = pl.reciprocal(l_sc[...], approx=False)
        o_ref[0] = (acc_sc[...] * inv_l).astype(o_ref.dtype)


# --------------------------------------------------------------------------
# Stage 3: output projection (row/column-tiled linear).
# --------------------------------------------------------------------------
def _linear_kernel(x_ref, w_ref, b_ref, o_ref):
    o = jnp.dot(x_ref[...], w_ref[...],
                preferred_element_type=jnp.float32) + b_ref[...]
    o_ref[...] = o.astype(o_ref.dtype)


# --------------------------------------------------------------------------
# Wrapper
# --------------------------------------------------------------------------
def multi_head_attention(query, key, value, params, num_heads, mask=None, *,
                         row_tile=256, col_tile=256, q_tile=512, kv_tile=512,
                         compute_dtype=None):
    """query/key/value: (B, S, D). params: (D, D) weights stored (in, out) and
    (1, D) biases.  Equivalent to MultiHeadAttention.forward with mask=None.

    compute_dtype: optional dtype (e.g. jnp.bfloat16) for the inter-stage
    Q/K/V/attention activations; halves HBM traffic between stages and uses
    the bf16 MXU rate in stage 2.  Default keeps the input dtype."""
    # TODO(synk): optional boolean `mask` path of the PyTorch module is not
    # implemented; only the mask=None forward is supported.
    assert mask is None, "mask path not implemented"

    B, S, D = query.shape
    assert D % num_heads == 0
    kd = D // num_heads
    scale = 1.0 / math.sqrt(kd)
    inter_dtype = compute_dtype if compute_dtype is not None else query.dtype
    vmem_limit = _vmem_limit_bytes()

    wq, bq = params["wq"], params["bq"]
    wk, bk = params["wk"], params["bk"]
    wv, bv = params["wv"], params["bv"]
    wo, bo = params["wo"], params["bo"]

    N = B * S
    TM = _pick_tile(N, row_tile, _sublane_multiple(query.dtype))
    TN = _pick_tile(D, col_tile, 128)

    # ---- Stage 1: Q/K/V projections (column-tiled weights). ----------------
    xq = query.reshape(N, D)
    shared = (key is query) and (value is query)   # self-attention dedup
    if shared:
        x_inputs = (xq,)
        x_specs = [pl.BlockSpec((TM, D), lambda i, j: (i, 0))]
    else:
        x_inputs = (xq, key.reshape(N, D), value.reshape(N, D))
        x_specs = [pl.BlockSpec((TM, D), lambda i, j: (i, 0))] * 3

    w_spec = pl.BlockSpec((D, TN), lambda i, j: (0, j))
    b_spec = pl.BlockSpec((1, TN), lambda i, j: (0, j))
    proj_out_spec = pl.BlockSpec((TM, TN), lambda i, j: (i, j))
    proj_shape = jax.ShapeDtypeStruct((N, D), inter_dtype)

    q, k, v = pl.pallas_call(
        functools.partial(_qkv_proj_kernel, scale, shared),
        out_shape=(proj_shape, proj_shape, proj_shape),
        grid_spec=pltpu.PrefetchScalarGridSpec(
            num_scalar_prefetch=0,
            grid=(N // TM, D // TN),
            in_specs=list(x_specs) + [w_spec, b_spec, w_spec, b_spec,
                                      w_spec, b_spec],
            out_specs=[proj_out_spec, proj_out_spec, proj_out_spec],
        ),
        compiler_params=pltpu.CompilerParams(
            dimension_semantics=("parallel", "parallel"),
            vmem_limit_bytes=vmem_limit),
    )(*x_inputs, wq, bq, wk, bk, wv, bv)

    # ---- Stage 2: flash attention with head axis in the grid. --------------
    BH = B * num_heads

    def split_heads(t):   # (N, D) -> (B*H, S, kd)   (matches torch split_heads)
        return t.reshape(B, S, num_heads, kd).transpose(0, 2, 1, 3) \
                .reshape(BH, S, kd)

    qh, kh, vh = split_heads(q), split_heads(k), split_heads(v)

    sub_m = _sublane_multiple(inter_dtype)
    TQ = _pick_tile(S, q_tile, sub_m)
    TK = _pick_tile(S, kv_tile, sub_m)

    q_spec = pl.BlockSpec((1, TQ, kd), lambda bh, qi, ki: (bh, qi, 0))
    kv_spec = pl.BlockSpec((1, TK, kd), lambda bh, qi, ki: (bh, ki, 0))
    o_spec = pl.BlockSpec((1, TQ, kd), lambda bh, qi, ki: (bh, qi, 0))

    attn = pl.pallas_call(
        _flash_attn_kernel,
        out_shape=jax.ShapeDtypeStruct((BH, S, kd), inter_dtype),
        grid_spec=pltpu.PrefetchScalarGridSpec(
            num_scalar_prefetch=0,
            grid=(BH, S // TQ, S // TK),
            in_specs=[q_spec, kv_spec, kv_spec],
            out_specs=o_spec,
            scratch_shapes=[
                pltpu.VMEM((TQ, 1), jnp.float32),    # running max
                pltpu.VMEM((TQ, 1), jnp.float32),    # running sum
                pltpu.VMEM((TQ, kd), jnp.float32),   # output accumulator
            ],
        ),
        compiler_params=pltpu.CompilerParams(
            dimension_semantics=("parallel", "parallel", "arbitrary"),
            vmem_limit_bytes=vmem_limit),
    )(qh, kh, vh)

    # ---- Stage 3: W_o projection (separate kernel, W_o not kept resident
    #      through the attention loop). -------------------------------------
    attn_c = attn.reshape(B, num_heads, S, kd).transpose(0, 2, 1, 3) \
                 .reshape(N, D)

    out = pl.pallas_call(
        _linear_kernel,
        out_shape=jax.ShapeDtypeStruct((N, D), query.dtype),
        grid_spec=pltpu.PrefetchScalarGridSpec(
            num_scalar_prefetch=0,
            grid=(N // TM, D // TN),
            in_specs=[pl.BlockSpec((TM, D), lambda i, j: (i, 0)),
                      pl.BlockSpec((D, TN), lambda i, j: (0, j)),
                      pl.BlockSpec((1, TN), lambda i, j: (0, j))],
            out_specs=pl.BlockSpec((TM, TN), lambda i, j: (i, j)),
        ),
        compiler_params=pltpu.CompilerParams(
            dimension_semantics=("parallel", "parallel"),
            vmem_limit_bytes=vmem_limit),
    )(attn_c, wo, bo)

    return out.reshape(B, S, D)


# --------------------------------------------------------------------------
# Pure-JAX reference and demo
# --------------------------------------------------------------------------
def _reference(query, key, value, params, num_heads):
    """Mirrors the PyTorch forward (mask=None)."""
    B, S, D = query.shape
    kd = D // num_heads

    def lin(x, w, b):
        return x @ w + b

    def split(x):
        return x.reshape(B, S, num_heads, kd).transpose(0, 2, 1, 3)

    q = split(lin(query, params["wq"], params["bq"]))
    k = split(lin(key, params["wk"], params["bk"]))
    v = split(lin(value, params["wv"], params["bv"]))

    scores = jnp.einsum("bhqd,bhkd->bhqk", q, k) / math.sqrt(kd)
    probs = jax.nn.softmax(scores, axis=-1)
    out = jnp.einsum("bhqk,bhkd->bhqd", probs, v)
    out = out.transpose(0, 2, 1, 3).reshape(B, S, D)
    return lin(out, params["wo"], params["bo"])


def init_params(key, model_dim):
    """Deterministic nn.Linear-style init; weights stored as (in, out)."""
    params = {}
    bound = 1.0 / math.sqrt(model_dim)
    names = ["q", "k", "v", "o"]
    keys = jax.random.split(key, 2 * len(names))
    for i, n in enumerate(names):
        w = jax.random.uniform(keys[2 * i], (model_dim, model_dim),
                               jnp.float32, -bound, bound)
        b = jax.random.uniform(keys[2 * i + 1], (1, model_dim),
                               jnp.float32, -bound, bound)
        params[f"w{n}"] = w
        params[f"b{n}"] = b
    return params


if __name__ == "__main__":
    B, S, D, H = 2, 8, 32, 4  # batch, seq, modelDim, numHeads

    root = jax.random.PRNGKey(0)
    k_p, k_q, k_k, k_v = jax.random.split(root, 4)

    params = init_params(k_p, D)
    query = jax.random.normal(k_q, (B, S, D), jnp.float32)
    key = jax.random.normal(k_k, (B, S, D), jnp.float32)
    value = jax.random.normal(k_v, (B, S, D), jnp.float32)

    out = multi_head_attention(query, key, value, params, H)
    out = jax.block_until_ready(out)

    ref = _reference(query, key, value, params, H)
    assert out.shape == (B, S, D)
    assert jnp.allclose(out, ref, atol=1e-3, rtol=1e-3), "mismatch vs reference"

    print("KERNEL_OK")
</pallas_src>

<mosaic_0001>
module attributes {stable_mosaic.version = 11 : i64} {
  func.func @_qkv_proj_kernel(%arg0: i32, %arg1: i32, %arg2: memref<16x32xf32, #tpu.memory_space<vmem>>, %arg3: memref<16x32xf32, #tpu.memory_space<vmem>>, %arg4: memref<16x32xf32, #tpu.memory_space<vmem>>, %arg5: memref<32x32xf32, #tpu.memory_space<vmem>>, %arg6: memref<1x32xf32, #tpu.memory_space<vmem>>, %arg7: memref<32x32xf32, #tpu.memory_space<vmem>>, %arg8: memref<1x32xf32, #tpu.memory_space<vmem>>, %arg9: memref<32x32xf32, #tpu.memory_space<vmem>>, %arg10: memref<1x32xf32, #tpu.memory_space<vmem>>, %arg11: memref<16x32xf32, #tpu.memory_space<vmem>>, %arg12: memref<16x32xf32, #tpu.memory_space<vmem>>, %arg13: memref<16x32xf32, #tpu.memory_space<vmem>>) attributes {dimension_semantics = [#tpu.dimension_semantics<parallel>, #tpu.dimension_semantics<parallel>], iteration_bounds = array<i64: 1, 1>, scalar_prefetch = 0 : i64, scratch_operands = 0 : i64, tpu.core_type = #tpu.core_type<tc>, window_params = [{transform_indices = @transform_0, window_bounds = array<i64: 16, 32>}, {transform_indices = @transform_1, window_bounds = array<i64: 16, 32>}, {transform_indices = @transform_2, window_bounds = array<i64: 16, 32>}, {transform_indices = @transform_3, window_bounds = array<i64: 32, 32>}, {transform_indices = @transform_4, window_bounds = array<i64: 1, 32>}, {transform_indices = @transform_5, window_bounds = array<i64: 32, 32>}, {transform_indices = @transform_6, window_bounds = array<i64: 1, 32>}, {transform_indices = @transform_7, window_bounds = array<i64: 32, 32>}, {transform_indices = @transform_8, window_bounds = array<i64: 1, 32>}, {transform_indices = @transform_9, window_bounds = array<i64: 16, 32>}, {transform_indices = @transform_10, window_bounds = array<i64: 16, 32>}, {transform_indices = @transform_11, window_bounds = array<i64: 16, 32>}]} {
    %c0 = arith.constant 0 : index
    %c0_0 = arith.constant 0 : index
    %0 = vector.load %arg2[%c0, %c0_0] : memref<16x32xf32, #tpu.memory_space<vmem>>, vector<16x32xf32>
    %c0_1 = arith.constant 0 : index
    %c0_2 = arith.constant 0 : index
    %1 = vector.load %arg3[%c0_1, %c0_2] : memref<16x32xf32, #tpu.memory_space<vmem>>, vector<16x32xf32>
    %c0_3 = arith.constant 0 : index
    %c0_4 = arith.constant 0 : index
    %2 = vector.load %arg4[%c0_3, %c0_4] : memref<16x32xf32, #tpu.memory_space<vmem>>, vector<16x32xf32>
    %c0_5 = arith.constant 0 : index
    %c0_6 = arith.constant 0 : index
    %3 = vector.load %arg5[%c0_5, %c0_6] : memref<32x32xf32, #tpu.memory_space<vmem>>, vector<32x32xf32>
    %cst = arith.constant dense<0.000000e+00> : vector<16x32xf32>
    %4 = tpu.matmul %0, %3, %cst {dimension_numbers = #tpu.dot_dimension_numbers<[1], [0], [0], [1], [0, 0, 1, 1], [], []>} : vector<16x32xf32>, vector<32x32xf32>, vector<16x32xf32> -> vector<16x32xf32>
    %c0_7 = arith.constant 0 : index
    %c0_8 = arith.constant 0 : index
    %5 = vector.load %arg6[%c0_7, %c0_8] : memref<1x32xf32, #tpu.memory_space<vmem>>, vector<1x32xf32>
    %6 = vector.broadcast %5 : vector<1x32xf32> to vector<16x32xf32>
    %7 = arith.addf %4, %6 : vector<16x32xf32>
    %c0_9 = arith.constant 0 : index
    %c0_10 = arith.constant 0 : index
    %8 = vector.load %arg7[%c0_9, %c0_10] : memref<32x32xf32, #tpu.memory_space<vmem>>, vector<32x32xf32>
    %cst_11 = arith.constant dense<0.000000e+00> : vector<16x32xf32>
    %9 = tpu.matmul %1, %8, %cst_11 {dimension_numbers = #tpu.dot_dimension_numbers<[1], [0], [0], [1], [0, 0, 1, 1], [], []>} : vector<16x32xf32>, vector<32x32xf32>, vector<16x32xf32> -> vector<16x32xf32>
    %c0_12 = arith.constant 0 : index
    %c0_13 = arith.constant 0 : index
    %10 = vector.load %arg8[%c0_12, %c0_13] : memref<1x32xf32, #tpu.memory_space<vmem>>, vector<1x32xf32>
    %11 = vector.broadcast %10 : vector<1x32xf32> to vector<16x32xf32>
    %12 = arith.addf %9, %11 : vector<16x32xf32>
    %c0_14 = arith.constant 0 : index
    %c0_15 = arith.constant 0 : index
    %13 = vector.load %arg9[%c0_14, %c0_15] : memref<32x32xf32, #tpu.memory_space<vmem>>, vector<32x32xf32>
    %cst_16 = arith.constant dense<0.000000e+00> : vector<16x32xf32>
    %14 = tpu.matmul %2, %13, %cst_16 {dimension_numbers = #tpu.dot_dimension_numbers<[1], [0], [0], [1], [0, 0, 1, 1], [], []>} : vector<16x32xf32>, vector<32x32xf32>, vector<16x32xf32> -> vector<16x32xf32>
    %c0_17 = arith.constant 0 : index
    %c0_18 = arith.constant 0 : index
    %15 = vector.load %arg10[%c0_17, %c0_18] : memref<1x32xf32, #tpu.memory_space<vmem>>, vector<1x32xf32>
    %16 = vector.broadcast %15 : vector<1x32xf32> to vector<16x32xf32>
    %17 = arith.addf %14, %16 : vector<16x32xf32>
    %cst_19 = arith.constant 0.353553385 : f32
    %18 = vector.broadcast %cst_19 : f32 to vector<16x32xf32>
    %19 = arith.mulf %7, %18 : vector<16x32xf32>
    %c0_20 = arith.constant 0 : index
    %c0_21 = arith.constant 0 : index
    %20 = vector.load %arg11[%c0_20, %c0_21] : memref<16x32xf32, #tpu.memory_space<vmem>>, vector<16x32xf32>
    tpu.vector_store %arg11[%c0_20, %c0_21], %19 {strides = array<i32>} : memref<16x32xf32, #tpu.memory_space<vmem>>, vector<16x32xf32>,
    %c0_22 = arith.constant 0 : index
    %c0_23 = arith.constant 0 : index
    %21 = vector.load %arg12[%c0_22, %c0_23] : memref<16x32xf32, #tpu.memory_space<vmem>>, vector<16x32xf32>
    tpu.vector_store %arg12[%c0_22, %c0_23], %12 {strides = array<i32>} : memref<16x32xf32, #tpu.memory_space<vmem>>, vector<16x32xf32>,
    %c0_24 = arith.constant 0 : index
    %c0_25 = arith.constant 0 : index
    %22 = vector.load %arg13[%c0_24, %c0_25] : memref<16x32xf32, #tpu.memory_space<vmem>>, vector<16x32xf32>
    tpu.vector_store %arg13[%c0_24, %c0_25], %17 {strides = array<i32>} : memref<16x32xf32, #tpu.memory_space<vmem>>, vector<16x32xf32>,
    return
  }
  func.func @transform_0(%arg0: i32, %arg1: i32) -> (i32, i32) {
    %c0_i32 = arith.constant 0 : i32
    %c0_i32_0 = arith.constant 0 : i32
    return %arg0, %c0_i32 : i32, i32
  }
  func.func @transform_1(%arg0: i32, %arg1: i32) -> (i32, i32) {
    %c0_i32 = arith.constant 0 : i32
    %c0_i32_0 = arith.constant 0 : i32
    return %arg0, %c0_i32 : i32, i32
  }
  func.func @transform_2(%arg0: i32, %arg1: i32) -> (i32, i32) {
    %c0_i32 = arith.constant 0 : i32
    %c0_i32_0 = arith.constant 0 : i32
    return %arg0, %c0_i32 : i32, i32
  }
  func.func @transform_3(%arg0: i32, %arg1: i32) -> (i32, i32) {
    %c0_i32 = arith.constant 0 : i32
    %c0_i32_0 = arith.constant 0 : i32
    return %c0_i32, %arg1 : i32, i32
  }
  func.func @transform_4(%arg0: i32, %arg1: i32) -> (i32, i32) {
    %c0_i32 = arith.constant 0 : i32
    %c0_i32_0 = arith.constant 0 : i32
    return %c0_i32, %arg1 : i32, i32
  }
  func.func @transform_5(%arg0: i32, %arg1: i32) -> (i32, i32) {
    %c0_i32 = arith.constant 0 : i32
    %c0_i32_0 = arith.constant 0 : i32
    return %c0_i32, %arg1 : i32, i32
  }
  func.func @transform_6(%arg0: i32, %arg1: i32) -> (i32, i32) {
    %c0_i32 = arith.constant 0 : i32
    %c0_i32_0 = arith.constant 0 : i32
    return %c0_i32, %arg1 : i32, i32
  }
  func.func @transform_7(%arg0: i32, %arg1: i32) -> (i32, i32) {
    %c0_i32 = arith.constant 0 : i32
    %c0_i32_0 = arith.constant 0 : i32
    return %c0_i32, %arg1 : i32, i32
  }
  func.func @transform_8(%arg0: i32, %arg1: i32) -> (i32, i32) {
    %c0_i32 = arith.constant 0 : i32
    %c0_i32_0 = arith.constant 0 : i32
    return %c0_i32, %arg1 : i32, i32
  }
  func.func @transform_9(%arg0: i32, %arg1: i32) -> (i32, i32) {
    %c0_i32 = arith.constant 0 : i32
    return %arg0, %arg1 : i32, i32
  }
  func.func @transform_10(%arg0: i32, %arg1: i32) -> (i32, i32) {
    %c0_i32 = arith.constant 0 : i32
    return %arg0, %arg1 : i32, i32
  }
  func.func @transform_11(%arg0: i32, %arg1: i32) -> (i32, i32) {
    %c0_i32 = arith.constant 0 : i32
    return %arg0, %arg1 : i32, i32
  }
}

</mosaic_0001>

<llo_original>
// kernel: tpu_custom_call.1
$region0: #{tpu_custom_call.1}
  #allocation0 [shape = 'u32[]', space=smem, size = 0x4, offset = 0x4, fixed_abs, tag = 'smem constant byte address 0x4 - core index']
  #allocation1 [shape = 'u32[144,128]{1,0:T(1,128)}', space=vmem, size = 0x12000, scoped, tag = 'internal scratch']
  %s0 = inlined_call_operand.hbm [shape: f32[16,32], index: 0, kind: input, shape index: {}]
  %s1 = inlined_call_operand.hbm [shape: f32[16,32], index: 1, kind: input, shape index: {}]
  %s2 = inlined_call_operand.hbm [shape: f32[16,32], index: 2, kind: input, shape index: {}]
  %s3 = inlined_call_operand.hbm [shape: f32[32,32], index: 3, kind: input, shape index: {}]
  %s4 = inlined_call_operand.vmem [shape: f32[1,32], index: 4, kind: input, shape index: {}]
  %s5 = inlined_call_operand.hbm [shape: f32[32,32], index: 5, kind: input, shape index: {}]
  %s6 = inlined_call_operand.vmem [shape: f32[1,32], index: 6, kind: input, shape index: {}]
  %s7 = inlined_call_operand.hbm [shape: f32[32,32], index: 7, kind: input, shape index: {}]
  %s8 = inlined_call_operand.vmem [shape: f32[1,32], index: 8, kind: input, shape index: {}]
  %s9 = inlined_call_operand.hbm [shape: f32[16,32], index: 9, kind: output, shape index: {0}]
  %s10 = inlined_call_operand.hbm [shape: f32[16,32], index: 10, kind: output, shape index: {1}]
  %s11 = inlined_call_operand.hbm [shape: f32[16,32], index: 11, kind: output, shape index: {2}]
  %12 = xla_tuple %s9, %s10, %s11
  %s13 = sld [smem:[#allocation0]]
  $region86: #{tpu_custom_call.1} parent=0
    _
  %s15 = ssub.s32 1, %s13
  %s16 = scalar_select 0, %s15, %s13
  $region1: #{tpu_custom_call.1} parent=0
    #allocation2 [shape = 'u8[8192]{0}', space=vmem, size = 0x2000, scoped, tag = 'input window, operand 0, single buffered']
    #allocation3 [shape = 's32[1]{0}', space=sflag, size = 0x4, scoped, tag = 'scoped memory for tpu_custom_call.1']
    #allocation4 [shape = 's32[1]{0}', space=sflag, size = 0x4, scoped, tag = 'scoped memory for tpu_custom_call.1']
    #allocation5 [shape = 'u8[8192]{0}', space=vmem, size = 0x2000, scoped, tag = 'input window, operand 1, single buffered']
    #allocation6 [shape = 's32[1]{0}', space=sflag, size = 0x4, scoped, tag = 'scoped memory for tpu_custom_call.1']
    #allocation7 [shape = 'u8[8192]{0}', space=vmem, size = 0x2000, scoped, tag = 'input window, operand 2, single buffered']
    #allocation8 [shape = 'u8[16384]{0}', space=vmem, size = 0x4000, scoped, tag = 'input window, operand 3, single buffered']
    #allocation9 [shape = 's32[1]{0}', space=sflag, size = 0x4, scoped, tag = 'scoped memory for tpu_custom_call.1']
    #allocation10 [shape = 'u8[16384]{0}', space=vmem, size = 0x4000, scoped, tag = 'input window, operand 5, single buffered']
    #allocation11 [shape = 'u8[16384]{0}', space=vmem, size = 0x4000, scoped, tag = 'input window, operand 7, single buffered']
    #allocation12 [shape = 's32[1]{0}', space=sflag, size = 0x4, scoped, tag = 'scoped memory for tpu_custom_call.1']
    #allocation13 [shape = 'u8[8192]{0}', space=vmem, size = 0x2000, scoped, tag = 'output window, operand 0, single buffered']
    #allocation14 [shape = 'u8[8192]{0}', space=vmem, size = 0x2000, scoped, tag = 'output window, operand 1, single buffered']
    #allocation15 [shape = 's32[1]{0}', space=sflag, size = 0x4, scoped, tag = 'scoped memory for tpu_custom_call.1']
    #allocation16 [shape = 'u8[8192]{0}', space=vmem, size = 0x2000, scoped, tag = 'output window, operand 2, single buffered']
    %17 = vsyncpa [#allocation3], 0
    %18 = vsyncpa [#allocation6], 0
    %19 = vsyncpa [#allocation9], 0
    %20 = vsyncpa [#allocation12], 0
    %21 = vsyncpa [#allocation4], 0
    %22 = vsyncpa [#allocation15], 0
    // Predicated region
    $region2: #{tpu_custom_call.1} parent=1 // pred_check
      _
    $region3: #{tpu_custom_call.1} parent=1 // pred_check_branch
      %24 = sbr.rel (0) target = $region5
    $region4: #{tpu_custom_call.1} parent=1 // pred_region
      %s26 = ssub.s32 256, 256
      %27 = vsyncadd [#allocation3], %s26
      %s28 = sshll.u32 [#allocation2], 4
      %s29 = int_to_ptr.vmem [resolvable:$true] %s28
      %34 = dma.hbm_to_vmem [thread:$0]  %s0, 256, %s29, [#allocation3], 128, 128, 8
    $region5: #{tpu_custom_call.1} parent=1 // pred_fallthru
      _
    // Predicated region
    $region6: #{tpu_custom_call.1} parent=1 // pred_check
      _
    $region7: #{tpu_custom_call.1} parent=1 // pred_check_branch
      %36 = sbr.rel (0) target = $region9
    $region8: #{tpu_custom_call.1} parent=1 // pred_region
      %s38 = ssub.s32 256, 256
      %39 = vsyncadd [#allocation6], %s38
      %s40 = sshll.u32 [#allocation5], 4
      %s41 = int_to_ptr.vmem [resolvable:$true] %s40
      %46 = dma.hbm_to_vmem [thread:$0]  %s1, 256, %s41, [#allocation6], 128, 128, 8
    $region9: #{tpu_custom_call.1} parent=1 // pred_fallthru
      _
    // Predicated region
    $region10: #{tpu_custom_call.1} parent=1 // pred_check
      _
    $region11: #{tpu_custom_call.1} parent=1 // pred_check_branch
      %48 = sbr.rel (0) target = $region13
    $region12: #{tpu_custom_call.1} parent=1 // pred_region
      %s50 = ssub.s32 256, 256
      %51 = vsyncadd [#allocation6], %s50
      %s52 = sshll.u32 [#allocation7], 4
      %s53 = int_to_ptr.vmem [resolvable:$true] %s52
      %58 = dma.hbm_to_vmem [thread:$0]  %s2, 256, %s53, [#allocation6], 128, 128, 8
    $region13: #{tpu_custom_call.1} parent=1 // pred_fallthru
      _
    // Predicated region
    $region14: #{tpu_custom_call.1} parent=1 // pred_check
      _
    $region15: #{tpu_custom_call.1} parent=1 // pred_check_branch
      %60 = sbr.rel (0) target = $region17
    $region16: #{tpu_custom_call.1} parent=1 // pred_region
      %s62 = ssub.s32 512, 512
      %63 = vsyncadd [#allocation9], %s62
      %s64 = sshll.u32 [#allocation8], 4
      %s65 = int_to_ptr.vmem [resolvable:$true] %s64
      %70 = dma.hbm_to_vmem [thread:$0]  %s3, 512, %s65, [#allocation9], 128, 128, 8
    $region17: #{tpu_custom_call.1} parent=1 // pred_fallthru
      _
    // Predicated region
    $region18: #{tpu_custom_call.1} parent=1 // pred_check
      _
    $region19: #{tpu_custom_call.1} parent=1 // pred_check_branch
      %72 = sbr.rel (0) target = $region21
    $region20: #{tpu_custom_call.1} parent=1 // pred_region
      _
    $region21: #{tpu_custom_call.1} parent=1 // pred_fallthru
      _
    // Predicated region
    $region22: #{tpu_custom_call.1} parent=1 // pred_check
      _
    $region23: #{tpu_custom_call.1} parent=1 // pred_check_branch
      %74 = sbr.rel (0) target = $region25
    $region24: #{tpu_custom_call.1} parent=1 // pred_region
      %s76 = ssub.s32 512, 512
      %77 = vsyncadd [#allocation9], %s76
      %s78 = sshll.u32 [#allocation10], 4
      %s79 = int_to_ptr.vmem [resolvable:$true] %s78
      %84 = dma.hbm_to_vmem [thread:$0]  %s5, 512, %s79, [#allocation9], 128, 128, 8
    $region25: #{tpu_custom_call.1} parent=1 // pred_fallthru
      _
    // Predicated region
    $region26: #{tpu_custom_call.1} parent=1 // pred_check
      _
    $region27: #{tpu_custom_call.1} parent=1 // pred_check_branch
      %86 = sbr.rel (0) target = $region29
    $region28: #{tpu_custom_call.1} parent=1 // pred_region
      _
    $region29: #{tpu_custom_call.1} parent=1 // pred_fallthru
      _
    // Predicated region
    $region30: #{tpu_custom_call.1} parent=1 // pred_check
      _
    $region31: #{tpu_custom_call.1} parent=1 // pred_check_branch
      %88 = sbr.rel (0) target = $region33
    $region32: #{tpu_custom_call.1} parent=1 // pred_region
      %s90 = ssub.s32 512, 512
      %91 = vsyncadd [#allocation12], %s90
      %s92 = sshll.u32 [#allocation11], 4
      %s93 = int_to_ptr.vmem [resolvable:$true] %s92
      %98 = dma.hbm_to_vmem [thread:$0]  %s7, 512, %s93, [#allocation12], 128, 128, 8
    $region33: #{tpu_custom_call.1} parent=1 // pred_fallthru
      _
    // Predicated region
    $region34: #{tpu_custom_call.1} parent=1 // pred_check
      _
    $region35: #{tpu_custom_call.1} parent=1 // pred_check_branch
      %100 = sbr.rel (0) target = $region37
    $region36: #{tpu_custom_call.1} parent=1 // pred_region
      _
    $region37: #{tpu_custom_call.1} parent=1 // pred_fallthru
      _
    // Predicated region
    $region38: #{tpu_custom_call.1} parent=1 // pred_check
      _
    $region39: #{tpu_custom_call.1} parent=1 // pred_check_branch
      %102 = sbr.rel (0) target = $region41
    $region40: #{tpu_custom_call.1} parent=1 // pred_region
      %103 = dma.done [#allocation3], 256
    $region41: #{tpu_custom_call.1} parent=1 // pred_fallthru
      _
    // Predicated region
    $region42: #{tpu_custom_call.1} parent=1 // pred_check
      _
    $region43: #{tpu_custom_call.1} parent=1 // pred_check_branch
      %105 = sbr.rel (0) target = $region45
    $region44: #{tpu_custom_call.1} parent=1 // pred_region
      %106 = dma.done [#allocation6], 256
    $region45: #{tpu_custom_call.1} parent=1 // pred_fallthru
      _
    // Predicated region
    $region46: #{tpu_custom_call.1} parent=1 // pred_check
      _
    $region47: #{tpu_custom_call.1} parent=1 // pred_check_branch
      %108 = sbr.rel (0) target = $region49
    $region48: #{tpu_custom_call.1} parent=1 // pred_region
      %109 = dma.done [#allocation6], 256
    $region49: #{tpu_custom_call.1} parent=1 // pred_fallthru
      _
    // Predicated region
    $region50: #{tpu_custom_call.1} parent=1 // pred_check
      _
    $region51: #{tpu_custom_call.1} parent=1 // pred_check_branch
      %111 = sbr.rel (0) target = $region53
    $region52: #{tpu_custom_call.1} parent=1 // pred_region
      %112 = dma.done [#allocation9], 512
    $region53: #{tpu_custom_call.1} parent=1 // pred_fallthru
      _
    // Predicated region
    $region54: #{tpu_custom_call.1} parent=1 // pred_check
      _
    $region55: #{tpu_custom_call.1} parent=1 // pred_check_branch
      %114 = sbr.rel (0) target = $region57
    $region56: #{tpu_custom_call.1} parent=1 // pred_region
      %115 = dma.done [#allocation9], 512
    $region57: #{tpu_custom_call.1} parent=1 // pred_fallthru
      _
    // Predicated region
    $region58: #{tpu_custom_call.1} parent=1 // pred_check
      _
    $region59: #{tpu_custom_call.1} parent=1 // pred_check_branch
      %117 = sbr.rel (0) target = $region61
    $region60: #{tpu_custom_call.1} parent=1 // pred_region
      %118 = dma.done [#allocation12], 512
    $region61: #{tpu_custom_call.1} parent=1 // pred_fallthru
      _
    %v119 = vld [vmem:[#allocation2] sm:$0xff]
    %v120 = vld [vmem:[#allocation2 + $0x8] sm:$0xff]
    %v121 = vld [vmem:[#allocation5] sm:$0xff]
    %v122 = vld [vmem:[#allocation5 + $0x8] sm:$0xff]
    %v123 = vld [vmem:[#allocation7] sm:$0xff]
    %v124 = vld [vmem:[#allocation7 + $0x8] sm:$0xff]
    %v125 = vld [vmem:[#allocation8] sm:$0xff]
    %v126 = vld [vmem:[#allocation8 + $0x8] sm:$0xff]
    %v127 = vld [vmem:[#allocation8 + $0x10] sm:$0xff]
    %v128 = vld [vmem:[#allocation8 + $0x18] sm:$0xff]
    %v129 = vld [vmem:[%s4] sm:$0x1]
    %v131 = vlaneseq
    %v132 = vshrl.u32 %v131, 7
    %v133 = vsub.s32 0, %v132
    %v134 = vrot.slane %v129, %v133
    %vm136 = vcmask 261120
    %v138 = vsel %vm136, %v119, 0
    %v141 = vsel %vm136, %v120, 0
    %143 = vmatprep.subr.mxu0 0.0
    %144 = vmatpush1.msra.mxu0 %v125
    %145 = vmatprep.subr.mxu0 0.0
    %146 = vmatpush1.msra.mxu0 %v126
    %147 = vmatprep.subr.mxu0 0.0
    %148 = vmatpush1.msra.mxu0 %v127
    %149 = vmatprep.subr.mxu0 0.0
    %150 = vmatpush1.msra.mxu0 %v128
    %151 = vmatprep.subr.mxu0 0.0
    %152 = vmatpush1.msra.mxu0 0.0
    %153 = vmatprep.subr.mxu0 0.0
    %154 = vmatpush1.msra.mxu0 0.0
    %155 = vmatprep.subr.mxu0 0.0
    %156 = vmatpush1.msra.mxu0 0.0
    %157 = vmatprep.subr.mxu0 0.0
    %158 = vmatpush1.msra.mxu0 0.0
    %159 = vmatprep.subr.mxu0 0.0
    %160 = vmatpush1.msra.mxu0 0.0
    %161 = vmatprep.subr.mxu0 0.0
    %162 = vmatpush1.msra.mxu0 0.0
    %163 = vmatprep.subr.mxu0 0.0
    %164 = vmatpush1.msra.mxu0 0.0
    %165 = vmatprep.subr.mxu0 0.0
    %166 = vmatpush1.msra.mxu0 0.0
    %167 = vmatprep.subr.mxu0 0.0
    %168 = vmatpush1.msra.mxu0 0.0
    %169 = vmatprep.subr.mxu0 0.0
    %170 = vmatpush1.msra.mxu0 0.0
    %171 = vmatprep.subr.mxu0 0.0
    %172 = vmatpush1.msra.mxu0 0.0
    %173 = vmatprep.subr.mxu0 0.0
    %174 = vmatpush1.msra.mxu0 0.0
    %175 = vmatprep.subr.mxu0 0.0
    %176 = vmatpush1.msra.mxu0 0.0
    %177 = vmatprep.subr.mxu0 0.0
    %178 = vmatpush1.msra.mxu0 0.0
    %179 = vmatprep.subr.mxu0 0.0
    %180 = vmatpush1.msra.mxu0 0.0
    %181 = vmatprep.subr.mxu0 0.0
    %182 = vmatpush1.msra.mxu0 0.0
    %183 = vmatprep.subr.mxu0 0.0
    %184 = vmatpush1.msra.mxu0 0.0
    %185 = vmatprep.subr.mxu0 0.0
    %186 = vmatpush1.msra.mxu0 0.0
    %187 = vmatprep.subr.mxu0 0.0
    %188 = vmatpush1.msra.mxu0 0.0
    %189 = vmatprep.subr.mxu0 0.0
    %190 = vmatpush1.msra.mxu0 0.0
    %191 = vmatprep.subr.mxu0 0.0
    %192 = vmatpush1.msra.mxu0 0.0
    %193 = vmatprep.subr.mxu0 0.0
    %194 = vmatpush1.msra.mxu0 0.0
    %195 = vmatprep.subr.mxu0 0.0
    %196 = vmatpush1.msra.mxu0 0.0
    %197 = vmatprep.subr.mxu0 0.0
    %198 = vmatpush1.msra.mxu0 0.0
    %199 = vmatprep.subr.mxu0 0.0
    %200 = vmatpush1.msra.mxu0 0.0
    %201 = vmatprep.subr.mxu0 0.0
    %202 = vmatpush1.msra.mxu0 0.0
    %203 = vmatprep.subr.mxu0 0.0
    %204 = vmatpush1.msra.mxu0 0.0
    %205 = vmatprep.subr.mxu0 0.0
    %206 = vmatpush1.msra.mxu0 0.0
    %207 = vmatprep.mubr.f32.mxu0 0.0
    %208 = vmatmul.mubr.f32.gmra.mrb[0].mxu0 %v138
    %v209 = vpop.f32.mrb[0].mxu0
    %v210 = vadd.f32 %v134, %v209
    %v211 = vpop.f32.mrb[0].mxu0
    %212 = vmatprep.mubr.f32.mxu0 0.0
    %213 = vmatmul.mubr.f32.gmra.mrb[0].mxu0 %v141
    %v214 = vpop.f32.mrb[0].mxu0
    %v215 = vadd.f32 %v134, %v214
    %v216 = vpop.f32.mrb[0].mxu0
    %217 = vdwg.mxu0
    %v218 = vld [vmem:[#allocation10] sm:$0xff]
    %v219 = vld [vmem:[#allocation10 + $0x8] sm:$0xff]
    %v220 = vld [vmem:[#allocation10 + $0x10] sm:$0xff]
    %v221 = vld [vmem:[#allocation10 + $0x18] sm:$0xff]
    %v222 = vld [vmem:[%s6] sm:$0x1]
    %v224 = vlaneseq
    %v225 = vshrl.u32 %v224, 7
    %v226 = vsub.s32 0, %v225
    %v227 = vrot.slane %v222, %v226
    %v230 = vsel %vm136, %v121, 0
    %v233 = vsel %vm136, %v122, 0
    %235 = vmatprep.subr.mxu0 0.0
    %236 = vmatpush1.msra.mxu0 %v218
    %237 = vmatprep.subr.mxu0 0.0
    %238 = vmatpush1.msra.mxu0 %v219
    %239 = vmatprep.subr.mxu0 0.0
    %240 = vmatpush1.msra.mxu0 %v220
    %241 = vmatprep.subr.mxu0 0.0
    %242 = vmatpush1.msra.mxu0 %v221
    %243 = vmatprep.subr.mxu0 0.0
    %244 = vmatpush1.msra.mxu0 0.0
    %245 = vmatprep.subr.mxu0 0.0
    %246 = vmatpush1.msra.mxu0 0.0
    %247 = vmatprep.subr.mxu0 0.0
    %248 = vmatpush1.msra.mxu0 0.0
    %249 = vmatprep.subr.mxu0 0.0
    %250 = vmatpush1.msra.mxu0 0.0
    %251 = vmatprep.subr.mxu0 0.0
    %252 = vmatpush1.msra.mxu0 0.0
    %253 = vmatprep.subr.mxu0 0.0
    %254 = vmatpush1.msra.mxu0 0.0
    %255 = vmatprep.subr.mxu0 0.0
    %256 = vmatpush1.msra.mxu0 0.0
    %257 = vmatprep.subr.mxu0 0.0
    %258 = vmatpush1.msra.mxu0 0.0
    %259 = vmatprep.subr.mxu0 0.0
    %260 = vmatpush1.msra.mxu0 0.0
    %261 = vmatprep.subr.mxu0 0.0
    %262 = vmatpush1.msra.mxu0 0.0
    %263 = vmatprep.subr.mxu0 0.0
    %264 = vmatpush1.msra.mxu0 0.0
    %265 = vmatprep.subr.mxu0 0.0
    %266 = vmatpush1.msra.mxu0 0.0
    %267 = vmatprep.subr.mxu0 0.0
    %268 = vmatpush1.msra.mxu0 0.0
    %269 = vmatprep.subr.mxu0 0.0
    %270 = vmatpush1.msra.mxu0 0.0
    %271 = vmatprep.subr.mxu0 0.0
    %272 = vmatpush1.msra.mxu0 0.0
    %273 = vmatprep.subr.mxu0 0.0
    %274 = vmatpush1.msra.mxu0 0.0
    %275 = vmatprep.subr.mxu0 0.0
    %276 = vmatpush1.msra.mxu0 0.0
    %277 = vmatprep.subr.mxu0 0.0
    %278 = vmatpush1.msra.mxu0 0.0
    %279 = vmatprep.subr.mxu0 0.0
    %280 = vmatpush1.msra.mxu0 0.0
    %281 = vmatprep.subr.mxu0 0.0
    %282 = vmatpush1.msra.mxu0 0.0
    %283 = vmatprep.subr.mxu0 0.0
    %284 = vmatpush1.msra.mxu0 0.0
    %285 = vmatprep.subr.mxu0 0.0
    %286 = vmatpush1.msra.mxu0 0.0
    %287 = vmatprep.subr.mxu0 0.0
    %288 = vmatpush1.msra.mxu0 0.0
    %289 = vmatprep.subr.mxu0 0.0
    %290 = vmatpush1.msra.mxu0 0.0
    %291 = vmatprep.subr.mxu0 0.0
    %292 = vmatpush1.msra.mxu0 0.0
    %293 = vmatprep.subr.mxu0 0.0
    %294 = vmatpush1.msra.mxu0 0.0
    %295 = vmatprep.subr.mxu0 0.0
    %296 = vmatpush1.msra.mxu0 0.0
    %297 = vmatprep.subr.mxu0 0.0
    %298 = vmatpush1.msra.mxu0 0.0
    %299 = vmatprep.mubr.f32.mxu0 0.0
    %300 = vmatmul.mubr.f32.gmra.mrb[0].mxu0 %v230
    %v301 = vpop.f32.mrb[0].mxu0
    %v302 = vadd.f32 %v227, %v301
    %v303 = vpop.f32.mrb[0].mxu0
    %304 = vmatprep.mubr.f32.mxu0 0.0
    %305 = vmatmul.mubr.f32.gmra.mrb[0].mxu0 %v233
    %v306 = vpop.f32.mrb[0].mxu0
    %v307 = vadd.f32 %v227, %v306
    %v308 = vpop.f32.mrb[0].mxu0
    %309 = vdwg.mxu0
    %v310 = vld [vmem:[#allocation11] sm:$0xff]
    %v311 = vld [vmem:[#allocation11 + $0x8] sm:$0xff]
    %v312 = vld [vmem:[#allocation11 + $0x10] sm:$0xff]
    %v313 = vld [vmem:[#allocation11 + $0x18] sm:$0xff]
    %v314 = vld [vmem:[%s8] sm:$0x1]
    %v316 = vlaneseq
    %v317 = vshrl.u32 %v316, 7
    %v318 = vsub.s32 0, %v317
    %v319 = vrot.slane %v314, %v318
    %v322 = vsel %vm136, %v123, 0
    %v325 = vsel %vm136, %v124, 0
    %327 = vmatprep.subr.mxu0 0.0
    %328 = vmatpush1.msra.mxu0 %v310
    %329 = vmatprep.subr.mxu0 0.0
    %330 = vmatpush1.msra.mxu0 %v311
    %331 = vmatprep.subr.mxu0 0.0
    %332 = vmatpush1.msra.mxu0 %v312
    %333 = vmatprep.subr.mxu0 0.0
    %334 = vmatpush1.msra.mxu0 %v313
    %335 = vmatprep.subr.mxu0 0.0
    %336 = vmatpush1.msra.mxu0 0.0
    %337 = vmatprep.subr.mxu0 0.0
    %338 = vmatpush1.msra.mxu0 0.0
    %339 = vmatprep.subr.mxu0 0.0
    %340 = vmatpush1.msra.mxu0 0.0
    %341 = vmatprep.subr.mxu0 0.0
    %342 = vmatpush1.msra.mxu0 0.0
    %343 = vmatprep.subr.mxu0 0.0
    %344 = vmatpush1.msra.mxu0 0.0
    %345 = vmatprep.subr.mxu0 0.0
    %346 = vmatpush1.msra.mxu0 0.0
    %347 = vmatprep.subr.mxu0 0.0
    %348 = vmatpush1.msra.mxu0 0.0
    %349 = vmatprep.subr.mxu0 0.0
    %350 = vmatpush1.msra.mxu0 0.0
    %351 = vmatprep.subr.mxu0 0.0
    %352 = vmatpush1.msra.mxu0 0.0
    %353 = vmatprep.subr.mxu0 0.0
    %354 = vmatpush1.msra.mxu0 0.0
    %355 = vmatprep.subr.mxu0 0.0
    %356 = vmatpush1.msra.mxu0 0.0
    %357 = vmatprep.subr.mxu0 0.0
    %358 = vmatpush1.msra.mxu0 0.0
    %359 = vmatprep.subr.mxu0 0.0
    %360 = vmatpush1.msra.mxu0 0.0
    %361 = vmatprep.subr.mxu0 0.0
    %362 = vmatpush1.msra.mxu0 0.0
    %363 = vmatprep.subr.mxu0 0.0
    %364 = vmatpush1.msra.mxu0 0.0
    %365 = vmatprep.subr.mxu0 0.0
    %366 = vmatpush1.msra.mxu0 0.0
    %367 = vmatprep.subr.mxu0 0.0
    %368 = vmatpush1.msra.mxu0 0.0
    %369 = vmatprep.subr.mxu0 0.0
    %370 = vmatpush1.msra.mxu0 0.0
    %371 = vmatprep.subr.mxu0 0.0
    %372 = vmatpush1.msra.mxu0 0.0
    %373 = vmatprep.subr.mxu0 0.0
    %374 = vmatpush1.msra.mxu0 0.0
    %375 = vmatprep.subr.mxu0 0.0
    %376 = vmatpush1.msra.mxu0 0.0
    %377 = vmatprep.subr.mxu0 0.0
    %378 = vmatpush1.msra.mxu0 0.0
    %379 = vmatprep.subr.mxu0 0.0
    %380 = vmatpush1.msra.mxu0 0.0
    %381 = vmatprep.subr.mxu0 0.0
    %382 = vmatpush1.msra.mxu0 0.0
    %383 = vmatprep.subr.mxu0 0.0
    %384 = vmatpush1.msra.mxu0 0.0
    %385 = vmatprep.subr.mxu0 0.0
    %386 = vmatpush1.msra.mxu0 0.0
    %387 = vmatprep.subr.mxu0 0.0
    %388 = vmatpush1.msra.mxu0 0.0
    %389 = vmatprep.subr.mxu0 0.0
    %390 = vmatpush1.msra.mxu0 0.0
    %391 = vmatprep.mubr.f32.mxu0 0.0
    %392 = vmatmul.mubr.f32.gmra.mrb[0].mxu0 %v322
    %v393 = vpop.f32.mrb[0].mxu0
    %v394 = vadd.f32 %v319, %v393
    %v395 = vpop.f32.mrb[0].mxu0
    %396 = vmatprep.mubr.f32.mxu0 0.0
    %397 = vmatmul.mubr.f32.gmra.mrb[0].mxu0 %v325
    %v398 = vpop.f32.mrb[0].mxu0
    %v399 = vadd.f32 %v319, %v398
    %v400 = vpop.f32.mrb[0].mxu0
    %401 = vdwg.mxu0
    %v402 = vmul.f32 %v210, 0.35355338
    %v403 = vmul.f32 %v215, 0.35355338
    %404 = vst.msk [vmem:[#allocation13] sm:$0xff] %vm136, %v402
    %405 = vst.msk [vmem:[#allocation13 + $0x8] sm:$0xff] %vm136, %v403
    %406 = vst.msk [vmem:[#allocation14] sm:$0xff] %vm136, %v302
    %407 = vst.msk [vmem:[#allocation14 + $0x8] sm:$0xff] %vm136, %v307
    %408 = vst.msk [vmem:[#allocation16] sm:$0xff] %vm136, %v394
    %409 = vst.msk [vmem:[#allocation16 + $0x8] sm:$0xff] %vm136, %v399
    // Predicated region
    $region62: #{tpu_custom_call.1} parent=1 // pred_check
      _
    $region63: #{tpu_custom_call.1} parent=1 // pred_check_branch
      %411 = sbr.rel (0) target = $region65
    $region64: #{tpu_custom_call.1} parent=1 // pred_region
      %s413 = ssub.s32 256, 256
      %414 = vsyncadd [#allocation4], %s413
      %s415 = sshll.u32 [#allocation13], 4
      %s416 = int_to_ptr.vmem [resolvable:$true] %s415
      %421 = dma.vmem_to_hbm [thread:$0]  %s416, 256, %s9, [#allocation4], 128, 128, 8
    $region65: #{tpu_custom_call.1} parent=1 // pred_fallthru
      _
    // Predicated region
    $region66: #{tpu_custom_call.1} parent=1 // pred_check
      _
    $region67: #{tpu_custom_call.1} parent=1 // pred_check_branch
      %423 = sbr.rel (0) target = $region69
    $region68: #{tpu_custom_call.1} parent=1 // pred_region
      %s425 = ssub.s32 256, 256
      %426 = vsyncadd [#allocation15], %s425
      %s427 = sshll.u32 [#allocation14], 4
      %s428 = int_to_ptr.vmem [resolvable:$true] %s427
      %433 = dma.vmem_to_hbm [thread:$0]  %s428, 256, %s10, [#allocation15], 128, 128, 8
    $region69: #{tpu_custom_call.1} parent=1 // pred_fallthru
      _
    // Predicated region
    $region70: #{tpu_custom_call.1} parent=1 // pred_check
      _
    $region71: #{tpu_custom_call.1} parent=1 // pred_check_branch
      %435 = sbr.rel (0) target = $region73
    $region72: #{tpu_custom_call.1} parent=1 // pred_region
      %s437 = ssub.s32 256, 256
      %438 = vsyncadd [#allocation15], %s437
      %s439 = sshll.u32 [#allocation16], 4
      %s440 = int_to_ptr.vmem [resolvable:$true] %s439
      %445 = dma.vmem_to_hbm [thread:$0]  %s440, 256, %s11, [#allocation15], 128, 128, 8
    $region73: #{tpu_custom_call.1} parent=1 // pred_fallthru
      _
    // Predicated region
    $region74: #{tpu_custom_call.1} parent=1 // pred_check
      _
    $region75: #{tpu_custom_call.1} parent=1 // pred_check_branch
      %447 = sbr.rel (0) target = $region77
    $region76: #{tpu_custom_call.1} parent=1 // pred_region
      %448 = dma.done [#allocation4], 256
    $region77: #{tpu_custom_call.1} parent=1 // pred_fallthru
      _
    // Predicated region
    $region78: #{tpu_custom_call.1} parent=1 // pred_check
      _
    $region79: #{tpu_custom_call.1} parent=1 // pred_check_branch
      %450 = sbr.rel (0) target = $region81
    $region80: #{tpu_custom_call.1} parent=1 // pred_region
      %451 = dma.done [#allocation15], 256
    $region81: #{tpu_custom_call.1} parent=1 // pred_fallthru
      _
    // Predicated region
    $region82: #{tpu_custom_call.1} parent=1 // pred_check
      _
    $region83: #{tpu_custom_call.1} parent=1 // pred_check_branch
      %453 = sbr.rel (0) target = $region85
    $region84: #{tpu_custom_call.1} parent=1 // pred_region
      %454 = dma.done [#allocation15], 256
    $region85: #{tpu_custom_call.1} parent=1 // pred_fallthru
      _
    %455 = vsyncpa [#allocation3], 1
    %456 = vsyncpa [#allocation6], 1
    %457 = vsyncpa [#allocation9], 1
    %458 = vsyncpa [#allocation12], 1
    %459 = vsyncpa [#allocation4], 1
    %460 = vsyncpa [#allocation15], 1

</llo_original>
